<compile_context>
chip_gen: v6e
topology: v6e:2x2x1
jax: 0.10.0
libtpu: 0.0.40
codegen_flags: <defaults>
</compile_context>

<pallas_src>
import jax
import jax.numpy as jnp
from jax.experimental import pallas as pl
from jax.experimental.pallas import tpu as pltpu

_LANES = 128
_MAX_ROW_TILE = 512  # 512 x 128 x 4B = 256 KiB per f32 block; ~1 MiB double-buffered in+out.


def _identity_classifier_kernel(x_ref, o_ref):
    # Empty nn.Sequential == identity: pass the tile straight through.
    o_ref[...] = x_ref[...]


def _round_up(a, m):
    return ((a + m - 1) // m) * m


def vggnet_binary_later_part_forward(x):
    """Pallas implementation of VGGNetBinaryLaterPart.forward.

    Args:
      x: NCHW array of shape (B, C, H, W) (any trailing dims are accepted).

    Returns:
      (B, C*H*W) array, same dtype — flattened input passed through the
      (empty) classifier.
    """
    b = x.shape[0]
    feat = 1
    for d in x.shape[1:]:
        feat *= d
    total = b * feat

    # Sublane alignment requirement scales with packing: 8 (f32), 16 (bf16), 32 (int8).
    itemsize = jnp.dtype(x.dtype).itemsize
    sublane_mult = max(8, 32 // itemsize)

    # Lane-dense slab: (rows, 128). Pad the tail so rows is tile-aligned.
    rows = _round_up(total, _LANES) // _LANES
    if rows >= _MAX_ROW_TILE:
        row_tile = _MAX_ROW_TILE
    else:
        row_tile = _round_up(rows, sublane_mult)
    rows_padded = _round_up(rows, row_tile)
    padded_total = rows_padded * _LANES

    # Flatten exactly like torch's x.view(x.size(0), -1) (row-major order),
    # then re-view as a lane-dense slab for the kernel. Both reshapes (and the
    # final un-reshape) are metadata-only; only the tail pad (if any) costs.
    flat = x.reshape(total)
    if padded_total != total:
        flat = jnp.pad(flat, (0, padded_total - total))
    slab = flat.reshape(rows_padded, _LANES)

    grid = (rows_padded // row_tile,)

    out_slab = pl.pallas_call(
        _identity_classifier_kernel,
        out_shape=jax.ShapeDtypeStruct((rows_padded, _LANES), slab.dtype),
        grid=grid,
        in_specs=[pl.BlockSpec((row_tile, _LANES), lambda i: (i, 0))],
        out_specs=pl.BlockSpec((row_tile, _LANES), lambda i: (i, 0)),
        compiler_params=pltpu.CompilerParams(
            dimension_semantics=("parallel",),
            vmem_limit_bytes=32 * 1024 * 1024,
        ),
    )(slab)

    # Undo the lane-dense view / padding and present the (B, feat) result.
    return out_slab.reshape(padded_total)[:total].reshape(b, feat)


if __name__ == "__main__":
    key = jax.random.PRNGKey(0)
    # Small shapes consistent with an NCHW conv-feature input: B=2, C=4, H=W=16.
    x = jax.random.normal(key, (2, 4, 16, 16), dtype=jnp.float32)

    y = vggnet_binary_later_part_forward(x)
    y = jax.block_until_ready(y)

    # Reference semantics check: flatten + identity.
    ref = x.reshape(x.shape[0], -1)
    assert y.shape == (2, 4 * 16 * 16), y.shape
    assert y.dtype == x.dtype
    assert bool(jnp.allclose(y, ref)), "mismatch vs reference flatten/identity"

    print("KERNEL_OK")
</pallas_src>

<mosaic_0001>
module attributes {stable_mosaic.version = 11 : i64} {
  func.func @_identity_classifier_kernel(%arg0: i32, %arg1: memref<16x128xf32, #tpu.memory_space<vmem>>, %arg2: memref<16x128xf32, #tpu.memory_space<vmem>>) attributes {dimension_semantics = [#tpu.dimension_semantics<parallel>], iteration_bounds = array<i64: 1>, scalar_prefetch = 0 : i64, scratch_operands = 0 : i64, tpu.core_type = #tpu.core_type<tc>, window_params = [{transform_indices = @transform_0, window_bounds = array<i64: 16, 128>}, {transform_indices = @transform_1, window_bounds = array<i64: 16, 128>}]} {
    %c0 = arith.constant 0 : index
    %c0_0 = arith.constant 0 : index
    %0 = vector.load %arg1[%c0, %c0_0] : memref<16x128xf32, #tpu.memory_space<vmem>>, vector<16x128xf32>
    %c0_1 = arith.constant 0 : index
    %c0_2 = arith.constant 0 : index
    %1 = vector.load %arg2[%c0_1, %c0_2] : memref<16x128xf32, #tpu.memory_space<vmem>>, vector<16x128xf32>
    tpu.vector_store %arg2[%c0_1, %c0_2], %0 {strides = array<i32>} : memref<16x128xf32, #tpu.memory_space<vmem>>, vector<16x128xf32>,
    return
  }
  func.func @transform_0(%arg0: i32) -> (i32, i32) {
    %c0_i32 = arith.constant 0 : i32
    %c0_i32_0 = arith.constant 0 : i32
    return %arg0, %c0_i32 : i32, i32
  }
  func.func @transform_1(%arg0: i32) -> (i32, i32) {
    %c0_i32 = arith.constant 0 : i32
    %c0_i32_0 = arith.constant 0 : i32
    return %arg0, %c0_i32 : i32, i32
  }
}

</mosaic_0001>

<llo_original>
// kernel: tpu_custom_call.1
$region0: #{tpu_custom_call.1}
  #allocation0 [shape = 'u32[]', space=smem, size = 0x4, offset = 0x4, fixed_abs, tag = 'smem constant byte address 0x4 - core index']
  #allocation1 [shape = 'u32[144,128]{1,0:T(1,128)}', space=vmem, size = 0x12000, scoped, tag = 'internal scratch']
  %s0 = inlined_call_operand.hbm [shape: f32[16,128], index: 0, kind: input, shape index: {}]
  %s1 = inlined_call_operand.hbm [shape: f32[16,128], index: 1, kind: output, shape index: {}]
  %s2 = sld [smem:[#allocation0]]
  $region18: #{tpu_custom_call.1} parent=0
    _
  %s4 = ssub.s32 1, %s2
  %s5 = scalar_select 0, %s4, %s2
  $region1: #{tpu_custom_call.1} parent=0
    #allocation2 [shape = 'u8[8192]{0}', space=vmem, size = 0x2000, scoped, tag = 'input window, operand 0, single buffered']
    #allocation3 [shape = 's32[1]{0}', space=sflag, size = 0x4, scoped, tag = 'scoped memory for tpu_custom_call.1']
    #allocation4 [shape = 's32[1]{0}', space=sflag, size = 0x4, scoped, tag = 'scoped memory for tpu_custom_call.1']
    #allocation5 [shape = 'u8[8192]{0}', space=vmem, size = 0x2000, scoped, tag = 'output window, operand 0, single buffered']
    %6 = vsyncpa [#allocation3], 0
    %7 = vsyncpa [#allocation4], 0
    // Predicated region
    $region2: #{tpu_custom_call.1} parent=1 // pred_check
      _
    $region3: #{tpu_custom_call.1} parent=1 // pred_check_branch
      %9 = sbr.rel (0) target = $region5
    $region4: #{tpu_custom_call.1} parent=1 // pred_region
      %s11 = ssub.s32 256, 256
      %12 = vsyncadd [#allocation3], %s11
      %s13 = sshll.u32 [#allocation2], 4
      %s14 = int_to_ptr.vmem [resolvable:$true] %s13
      %19 = dma.hbm_to_vmem [thread:$0]  %s0, 256, %s14, [#allocation3], 128, 128, 8
    $region5: #{tpu_custom_call.1} parent=1 // pred_fallthru
      _
    // Predicated region
    $region6: #{tpu_custom_call.1} parent=1 // pred_check
      _
    $region7: #{tpu_custom_call.1} parent=1 // pred_check_branch
      %21 = sbr.rel (0) target = $region9
    $region8: #{tpu_custom_call.1} parent=1 // pred_region
      %22 = dma.done [#allocation3], 256
    $region9: #{tpu_custom_call.1} parent=1 // pred_fallthru
      _
    %v23 = vld [vmem:[#allocation2] sm:$0xff]
    %v24 = vld [vmem:[#allocation2 + $0x8] sm:$0xff]
    %25 = vst [vmem:[#allocation5] sm:$0xff] %v23
    %26 = vst [vmem:[#allocation5 + $0x8] sm:$0xff] %v24
    // Predicated region
    $region10: #{tpu_custom_call.1} parent=1 // pred_check
      _
    $region11: #{tpu_custom_call.1} parent=1 // pred_check_branch
      %28 = sbr.rel (0) target = $region13
    $region12: #{tpu_custom_call.1} parent=1 // pred_region
      %s30 = ssub.s32 256, 256
      %31 = vsyncadd [#allocation4], %s30
      %s32 = sshll.u32 [#allocation5], 4
      %s33 = int_to_ptr.vmem [resolvable:$true] %s32
      %38 = dma.vmem_to_hbm [thread:$0]  %s33, 256, %s1, [#allocation4], 128, 128, 8
    $region13: #{tpu_custom_call.1} parent=1 // pred_fallthru
      _
    // Predicated region
    $region14: #{tpu_custom_call.1} parent=1 // pred_check
      _
    $region15: #{tpu_custom_call.1} parent=1 // pred_check_branch
      %40 = sbr.rel (0) target = $region17
    $region16: #{tpu_custom_call.1} parent=1 // pred_region
      %41 = dma.done [#allocation4], 256
    $region17: #{tpu_custom_call.1} parent=1 // pred_fallthru
      _
    %42 = vsyncpa [#allocation3], 1
    %43 = vsyncpa [#allocation4], 1

</llo_original>
